<compile_context>
chip_gen: v5e
topology: v5e:2x2
jax: 0.10.0
libtpu: 0.0.40
codegen_flags: <defaults>
</compile_context>

<pallas_src>
import re
from functools import partial

import jax
import jax.numpy as jnp
from jax.experimental import pallas as pl
from jax.experimental.pallas import tpu as pltpu


def _cdiv(a, b):
    return -(-a // b)


def _round_up(a, b):
    return _cdiv(a, b) * b


def _tpu_generation(default=6):
    """Best-effort TPU generation from the device kind string."""
    try:
        kind = jax.devices()[0].device_kind
        m = re.search(r"(\d+)", kind)
        if m:
            return int(m.group(1))
    except Exception:
        pass
    return default


def _vmem_capacity_bytes():
    try:
        cap = getattr(pltpu.get_tpu_info(), "vmem_capacity_bytes", None)
        if cap:
            return int(cap)
    except Exception:
        pass
    # Generation-aware fallback: only v7x-class parts have 64 MiB per core;
    # defaulting to 64 MiB on v5e/v6e would silently halve the tile budget.
    return (64 if _tpu_generation() >= 7 else 128) * 1024 * 1024


def _sublane_rows(c, itemsize):
    # VMEM packs 8 f32 / 16 bf16 / 32 int8 rows per (8, 128) vreg tile.
    return _round_up(max(c, 1), max(32 // max(itemsize, 1), 8))


def _pick_tile_m(m, n, c_in, c_out, in_bytes, out_bytes, fixed_bytes):
    """Lane tile of the flattened spatial axis, sized from VMEM capacity."""
    cap = _vmem_capacity_bytes()
    budget = max(int(cap * 0.5) - fixed_bytes, 4 << 20)   # headroom: w/b, scratch
    # Double-buffered input + output block bytes per column (sublane-rounded).
    bytes_per_col = 2 * (_sublane_rows(c_in, in_bytes) * in_bytes
                         + _sublane_rows(c_out, out_bytes) * out_bytes)
    tile_m = budget // bytes_per_col
    tile_m = min(tile_m, 32768)                  # diminishing returns past this
    tile_m = min(tile_m, _round_up(m, 128))      # never bigger than padded M
    tile_m = max(128, (tile_m // 128) * 128)     # lane-dense multiple of 128

    # Rebalance: split M into near-equal 128-granular tiles so the ragged tail
    # does not waste most of a padded tile.
    k = _cdiv(m, tile_m)
    tile_m = max(128, min(tile_m, _round_up(_cdiv(m, k), 128)))

    steps = lambda t: n * _cdiv(m, t)
    # v7x megacore: keep halving until there are >= 2 grid steps.
    while steps(tile_m) < 2 and tile_m > 128:
        tile_m = max(128, ((tile_m // 2) // 128) * 128)
    # Prefer an even total step count (two TensorCores, balanced work) when the
    # grid is small; only search down to ~tile_m/2 so per-step overhead stays low.
    if steps(tile_m) % 2 == 1 and steps(tile_m) < 8 and tile_m > 128:
        floor = max(128, ((tile_m // 2) // 128) * 128)
        cand = tile_m - 128
        while cand >= floor:
            if steps(cand) % 2 == 0:
                tile_m = cand
                break
            cand -= 128
    return tile_m


def _conv1x1_kernel(w_ref, b_ref, x_ref, o_ref, *, compute_dt):
    # w: (C_out, C_in) compute_dt (resident), b: (C_out, 1) f32 (resident),
    # x: (C_in, TM), o: (C_out, TM).
    x = x_ref[...].astype(compute_dt)        # in-kernel cast: no extra HBM pass
    acc = jnp.dot(w_ref[...], x, preferred_element_type=jnp.float32)
    o_ref[...] = (acc + b_ref[...]).astype(o_ref.dtype)


def _conv1x1_pallas(x3, weight, bias, *, out_dtype, mxu_dtype):
    """x3: (N, C_in, M), weight: (C_out, C_in), bias: (C_out,) -> (N, C_out, M)."""
    n, c_in, m = x3.shape
    c_out = weight.shape[0]
    compute_dt = jnp.dtype(x3.dtype if mxu_dtype is None else mxu_dtype)
    out_dtype = jnp.dtype(out_dtype)

    in_bytes = jnp.dtype(x3.dtype).itemsize
    out_bytes = out_dtype.itemsize
    # Resident weight/bias (double-buffered) + Mosaic internal scratch slack.
    fixed_bytes = (2 * _round_up(c_out, 8) * _round_up(c_in, 128) * compute_dt.itemsize
                   + 2 * _round_up(c_out, 8) * 128 * 4
                   + (2 << 20))
    tile_m = _pick_tile_m(m, n, c_in, c_out, in_bytes, out_bytes, fixed_bytes)

    m_pad = _round_up(m, tile_m)
    if m_pad != m:
        # Pad only the small pre-upsample slab (ragged tail only).
        x3 = jnp.pad(x3, ((0, 0), (0, 0), (0, m_pad - m)))

    w2d = weight.astype(compute_dt)                  # tiny, pre-cast is free
    b2d = bias.reshape(c_out, 1).astype(jnp.float32)

    grid = (n, m_pad // tile_m)
    needed_vmem = (2 * tile_m * (_sublane_rows(c_in, in_bytes) * in_bytes
                                 + _sublane_rows(c_out, out_bytes) * out_bytes)
                   + fixed_bytes)
    cap = _vmem_capacity_bytes()
    vmem_limit = int(min(cap * 0.92, max(needed_vmem + (8 << 20), 32 << 20)))

    y3 = pl.pallas_call(
        partial(_conv1x1_kernel, compute_dt=compute_dt),
        out_shape=jax.ShapeDtypeStruct((n, c_out, m_pad), out_dtype),
        grid_spec=pltpu.PrefetchScalarGridSpec(
            num_scalar_prefetch=0,
            grid=grid,
            in_specs=[
                pl.BlockSpec((c_out, c_in), lambda b, i: (0, 0)),   # weight (resident)
                pl.BlockSpec((c_out, 1), lambda b, i: (0, 0)),      # bias (resident)
                pl.BlockSpec((None, c_in, tile_m), lambda b, i: (b, 0, i)),
            ],
            out_specs=pl.BlockSpec((None, c_out, tile_m), lambda b, i: (b, 0, i)),
        ),
        compiler_params=pltpu.CompilerParams(
            dimension_semantics=("parallel", "parallel"),
            vmem_limit_bytes=vmem_limit,
        ),
    )(w2d, b2d, x3)

    if m_pad != m:
        y3 = y3[:, :, :m]
    return y3


def upsample_layer_forward(x, weight, bias, pool_op_kernel_size, mode="nearest",
                           out_dtype=None, mxu_dtype="auto"):
    """Pallas implementation of UpsampleLayer.forward (channel-first layout).

    x:      (N, C_in, *spatial)        e.g. NCDHW for Conv3d
    weight: (C_out, C_in, 1, ...)      conv kernel_size=1 weight
    bias:   (C_out,)
    out_dtype: optional narrower output dtype (e.g. jnp.bfloat16); the
        upsampled output write dominates HBM traffic, so halving it is the
        single biggest bandwidth lever.  Default keeps x.dtype (bit-exact).
    mxu_dtype: "auto" (default) casts the MXU operands to bf16 *inside* the
        kernel only on v5-class chips at >=256 channels (f32 HBM I/O and f32
        accumulation kept); None disables; or pass an explicit dtype.
    """
    assert mode == "nearest"
    n, c_in = x.shape[:2]
    spatial = tuple(int(s) for s in x.shape[2:])
    scales = tuple(int(s) for s in pool_op_kernel_size)
    assert len(scales) == len(spatial), (scales, spatial)
    c_out = weight.shape[0]

    if isinstance(mxu_dtype, str) and mxu_dtype == "auto":
        mxu_dtype = None
        if (x.dtype == jnp.float32 and min(c_in, c_out) >= 256
                and _tpu_generation() <= 5):
            mxu_dtype = jnp.bfloat16   # v5e MXU headroom at big decoder stages
    if out_dtype is None:
        out_dtype = x.dtype

    m = 1
    for s_ in spatial:
        m *= s_

    # --- Pallas hot path: channel matmul on the ORIGINAL (pre-upsample) tensor.
    x3 = x.reshape(n, c_in, m)                               # free, no transpose
    y3 = _conv1x1_pallas(x3, weight.reshape(c_out, c_in), bias,
                         out_dtype=out_dtype, mxu_dtype=mxu_dtype)

    # --- Nearest upsample (integer scale == exact repeat) applied to the conv
    # OUTPUT: one fused broadcast + free reshapes = a single HBM pass (the
    # final tensor has to be written once regardless).
    if all(s_ == 1 for s_ in scales):
        return y3.reshape((n, c_out) + spatial)
    expand = (n, c_out) + tuple(v for d_ in spatial for v in (d_, 1))
    bshape = (n, c_out) + tuple(v for d_, s_ in zip(spatial, scales) for v in (d_, s_))
    final = (n, c_out) + tuple(d_ * s_ for d_, s_ in zip(spatial, scales))
    return jnp.broadcast_to(y3.reshape(expand), bshape).reshape(final)


if __name__ == "__main__":
    key = jax.random.PRNGKey(0)
    k_x, k_w, k_b = jax.random.split(key, 3)

    # small shapes: batch=2, C_in=4, C_out=8, spatial=8^3, scale=(2,2,2)
    N, C_in, C_out = 2, 4, 8
    D = H = W = 8
    scale = (2, 2, 2)

    x = jax.random.normal(k_x, (N, C_in, D, H, W), dtype=jnp.float32)
    weight = jax.random.normal(k_w, (C_out, C_in, 1, 1, 1), dtype=jnp.float32) * 0.1
    bias = jax.random.normal(k_b, (C_out,), dtype=jnp.float32) * 0.1

    fwd = jax.jit(lambda a, w, b: upsample_layer_forward(a, w, b, scale, mode="nearest"))
    out = jax.block_until_ready(fwd(x, weight, bias))

    # pure-JAX reference: F.interpolate(nearest) + Conv3d(kernel_size=1)
    x_up = jnp.repeat(jnp.repeat(jnp.repeat(x, 2, axis=2), 2, axis=3), 2, axis=4)
    ref = jnp.einsum("oc,ncdhw->nodhw", weight.reshape(C_out, C_in), x_up) \
        + bias.reshape(1, C_out, 1, 1, 1)

    assert out.shape == (N, C_out, D * 2, H * 2, W * 2), out.shape
    assert out.dtype == x.dtype, out.dtype
    assert jnp.allclose(out, ref, atol=1e-5, rtol=1e-5), \
        float(jnp.max(jnp.abs(out - ref)))

    print("KERNEL_OK")
</pallas_src>

<mosaic_0001>
module attributes {stable_mosaic.version = 11 : i64} {
  func.func @_conv1x1_kernel(%arg0: i32, %arg1: i32, %arg2: memref<8x4xf32, #tpu.memory_space<vmem>>, %arg3: memref<8x1xf32, #tpu.memory_space<vmem>>, %arg4: memref<1x4x512xf32, #tpu.memory_space<vmem>>, %arg5: memref<1x8x512xf32, #tpu.memory_space<vmem>>) attributes {dimension_semantics = [#tpu.dimension_semantics<parallel>, #tpu.dimension_semantics<parallel>], iteration_bounds = array<i64: 2, 1>, scalar_prefetch = 0 : i64, scratch_operands = 0 : i64, tpu.core_type = #tpu.core_type<tc>, window_params = [{pipeline_mode = #tpu.pipeline_mode<synchronous>, transform_indices = @transform_0, window_bounds = array<i64: 8, 4>}, {pipeline_mode = #tpu.pipeline_mode<synchronous>, transform_indices = @transform_1, window_bounds = array<i64: 8, 1>}, {transform_indices = @transform_2, window_bounds = array<i64: 1, 4, 512>}, {transform_indices = @transform_3, window_bounds = array<i64: 1, 8, 512>}]} {
    %c0 = arith.constant 0 : index
    %c0_0 = arith.constant 0 : index
    %c0_1 = arith.constant 0 : index
    %0 = vector.load %arg4[%c0, %c0_0, %c0_1] : memref<1x4x512xf32, #tpu.memory_space<vmem>>, vector<1x4x512xf32>
    %1 = vector.shape_cast %0 : vector<1x4x512xf32> to vector<4x512xf32>
    %c0_2 = arith.constant 0 : index
    %c0_3 = arith.constant 0 : index
    %2 = vector.load %arg2[%c0_2, %c0_3] : memref<8x4xf32, #tpu.memory_space<vmem>>, vector<8x4xf32>
    %cst = arith.constant dense<0.000000e+00> : vector<8x512xf32>
    %3 = tpu.matmul %2, %1, %cst {dimension_numbers = #tpu.dot_dimension_numbers<[1], [0], [0], [1], [0, 0, 1, 1], [], []>} : vector<8x4xf32>, vector<4x512xf32>, vector<8x512xf32> -> vector<8x512xf32>
    %c0_4 = arith.constant 0 : index
    %c0_5 = arith.constant 0 : index
    %4 = vector.load %arg3[%c0_4, %c0_5] : memref<8x1xf32, #tpu.memory_space<vmem>>, vector<8x1xf32>
    %5 = vector.broadcast %4 : vector<8x1xf32> to vector<8x512xf32>
    %6 = arith.addf %3, %5 : vector<8x512xf32>
    %c0_6 = arith.constant 0 : index
    %c0_7 = arith.constant 0 : index
    %c0_8 = arith.constant 0 : index
    %7 = vector.load %arg5[%c0_6, %c0_7, %c0_8] : memref<1x8x512xf32, #tpu.memory_space<vmem>>, vector<1x8x512xf32>
    %8 = vector.shape_cast %7 : vector<1x8x512xf32> to vector<8x512xf32>
    %9 = vector.shape_cast %6 : vector<8x512xf32> to vector<1x8x512xf32>
    tpu.vector_store %arg5[%c0_6, %c0_7, %c0_8], %9 {strides = array<i32>} : memref<1x8x512xf32, #tpu.memory_space<vmem>>, vector<1x8x512xf32>,
    return
  }
  func.func @transform_0(%arg0: i32, %arg1: i32) -> (i32, i32) {
    %c0_i32 = arith.constant 0 : i32
    %c0_i32_0 = arith.constant 0 : i32
    %c0_i32_1 = arith.constant 0 : i32
    return %c0_i32, %c0_i32_0 : i32, i32
  }
  func.func @transform_1(%arg0: i32, %arg1: i32) -> (i32, i32) {
    %c0_i32 = arith.constant 0 : i32
    %c0_i32_0 = arith.constant 0 : i32
    %c0_i32_1 = arith.constant 0 : i32
    return %c0_i32, %c0_i32_0 : i32, i32
  }
  func.func @transform_2(%arg0: i32, %arg1: i32) -> (i32, i32, i32) {
    %c0_i32 = arith.constant 0 : i32
    %c0_i32_0 = arith.constant 0 : i32
    return %arg0, %c0_i32, %arg1 : i32, i32, i32
  }
  func.func @transform_3(%arg0: i32, %arg1: i32) -> (i32, i32, i32) {
    %c0_i32 = arith.constant 0 : i32
    %c0_i32_0 = arith.constant 0 : i32
    return %arg0, %c0_i32, %arg1 : i32, i32, i32
  }
}

</mosaic_0001>

<llo_original>
// kernel: _lambda_.1
$region0: #{_lambda_.1}
  #allocation0 [shape = 'u32[]', space=smem, size = 0x4, offset = 0x4, fixed_abs, tag = 'smem constant byte address 0x4 - core index']
  #allocation1 [shape = 'u32[72,128]{1,0:T(1,128)}', space=vmem, size = 0x9000, scoped, tag = 'internal scratch']
  %s0 = inlined_call_operand.vmem [shape: f32[8,4], index: 0, kind: input, shape index: {}]
  %s1 = inlined_call_operand.vmem [shape: f32[8,1], index: 1, kind: input, shape index: {}]
  %s2 = inlined_call_operand.vmem [shape: f32[2,4,512], index: 2, kind: input, shape index: {}]
  %s3 = inlined_call_operand.vmem [shape: f32[2,8,512], index: 3, kind: output, shape index: {}]
  %s4 = sld [smem:[#allocation0]]
  $region45: #{_lambda_.1} parent=0
    _
  %s6 = ssub.s32 1, %s4
  %s7 = scalar_select 0, %s6, %s4
  loop: start=0, step=1, limit=4
  $region2: #{_lambda_.1} parent=0 // loop_pre_header
    _
  $region3: #{_lambda_.1} parent=0 // loop_header
    %s9 = sphi 0, %s13
    %p10 = scmp.ge.s32.totalorder %s9, 4
    %s16 = sphi 0, %s28
    %s17 = sphi 0, %s24
    %s18 = sphi 0, %s16
    %s19 = sphi 0, %s17
    %s20 = sphi 0, %s18
    %s21 = sphi 0, %s19
    %s29 = sphi 0, %s29
    %s31 = sphi 0, %s29
    %s32 = sphi 0, %s31
    %s46 = sphi 0, %s32
    %s50 = sphi 0, %s50
    %s52 = sphi 0, %s50
    %s53 = sphi 0, %s52
    %s67 = sphi 0, %s53
    %s75 = sphi 0, %s77
    %s78 = sphi 0, %s75
    %s79 = sphi 0, %s78
    %s95 = sphi 0, %s79
    %s103 = sphi 0, %s105
    %s106 = sphi 0, %s103
    %s107 = sphi 0, %s106
    %s123 = sphi 0, %s107
  $region4: #{_lambda_.1} parent=0 // loop_header_branch
    %12 = sbr.rel (%p10) target = $region8
  $region5: #{_lambda_.1} parent=0 // loop_body
    %s14 = ssub.s32 %s9, 1
    %s15 = ssub.s32 %s9, 2
    %s22 = sadd.s32 1, %s17
    %p23 = scmp.ge.s32.totalorder %s22, 1
    %s24 = scalar_select %p23, 0, %s22
    %s25 = sadd.s32 1, %s16
    %s26 = scalar_select %p23, %s25, %s16
    %p27 = scmp.ge.s32.totalorder %s26, 2
    %s28 = scalar_select %p27, 0, %s26
    %s30 = sadd.s32 %s29, 1
    %p33 = scmp.eq.s32.totalorder %s9, 1
    %p34 = scmp.ne.s32.totalorder %s29, %s31
    %p35 = scmp.eq.s32.totalorder %s9, 0
    %p36 = por %p34, %p35
    %p37 = scmp.ne.s32.totalorder %s29, %s31
    %p38 = scmp.eq.s32.totalorder %s14, 1
    %p39 = por %p37, %p38
    %p40 = scmp.ne.s32.totalorder %s31, %s32
    %p41 = scmp.eq.s32.totalorder %s14, 0
    %p42 = por %p40, %p41
    %p43 = scmp.ne.s32.totalorder %s31, %s32
    %p44 = scmp.eq.s32.totalorder %s15, 1
    %p45 = por %p43, %p44
    %p47 = scmp.ne.s32.totalorder %s32, %s46
    %p48 = scmp.eq.s32.totalorder %s15, 0
    %p49 = por %p47, %p48
    %s51 = sadd.s32 %s50, 1
    %p54 = scmp.eq.s32.totalorder %s9, 1
    %p55 = scmp.ne.s32.totalorder %s50, %s52
    %p56 = scmp.eq.s32.totalorder %s9, 0
    %p57 = por %p55, %p56
    %p58 = scmp.ne.s32.totalorder %s50, %s52
    %p59 = scmp.eq.s32.totalorder %s14, 1
    %p60 = por %p58, %p59
    %p61 = scmp.ne.s32.totalorder %s52, %s53
    %p62 = scmp.eq.s32.totalorder %s14, 0
    %p63 = por %p61, %p62
    %p64 = scmp.ne.s32.totalorder %s52, %s53
    %p65 = scmp.eq.s32.totalorder %s15, 1
    %p66 = por %p64, %p65
    %p68 = scmp.ne.s32.totalorder %s53, %s67
    %p69 = scmp.eq.s32.totalorder %s15, 0
    %p70 = por %p68, %p69
    %s71 = ssub.s32 %s16, %s28
    %s72 = ssub.s32 %s17, %s24
    %s73 = sor.u32 %s71, %s72
    %p74 = scmp.eq.s32.totalorder %s73, 0
    %s76 = sadd.s32 %s75, 1
    %s77 = scalar_select %p74, %s75, %s76
    %p80 = pneg %p74
    %p81 = scmp.eq.s32.totalorder %s9, 1
    %p82 = por %p80, %p81
    %p83 = scmp.ne.s32.totalorder %s75, %s78
    %p84 = scmp.eq.s32.totalorder %s9, 0
    %p85 = por %p83, %p84
    %p86 = scmp.ne.s32.totalorder %s75, %s78
    %p87 = scmp.eq.s32.totalorder %s14, 1
    %p88 = por %p86, %p87
    %p89 = scmp.ne.s32.totalorder %s78, %s79
    %p90 = scmp.eq.s32.totalorder %s14, 0
    %p91 = por %p89, %p90
    %p92 = scmp.ne.s32.totalorder %s78, %s79
    %p93 = scmp.eq.s32.totalorder %s15, 1
    %p94 = por %p92, %p93
    %p96 = scmp.ne.s32.totalorder %s79, %s95
    %p97 = scmp.eq.s32.totalorder %s15, 0
    %p98 = por %p96, %p97
    %s99 = ssub.s32 %s16, %s28
    %s100 = ssub.s32 %s17, %s24
    %s101 = sor.u32 %s99, %s100
    %p102 = scmp.eq.s32.totalorder %s101, 0
    %s104 = sadd.s32 %s103, 1
    %s105 = scalar_select %p102, %s103, %s104
    %p108 = pneg %p102
    %p109 = scmp.eq.s32.totalorder %s9, 1
    %p110 = por %p108, %p109
    %p111 = scmp.ne.s32.totalorder %s103, %s106
    %p112 = scmp.eq.s32.totalorder %s9, 0
    %p113 = por %p111, %p112
    %p114 = scmp.ne.s32.totalorder %s103, %s106
    %p115 = scmp.eq.s32.totalorder %s14, 1
    %p116 = por %p114, %p115
    %p117 = scmp.ne.s32.totalorder %s106, %s107
    %p118 = scmp.eq.s32.totalorder %s14, 0
    %p119 = por %p117, %p118
    %p120 = scmp.ne.s32.totalorder %s106, %s107
    %p121 = scmp.eq.s32.totalorder %s15, 1
    %p122 = por %p120, %p121
    %p124 = scmp.ne.s32.totalorder %s107, %s123
    %p125 = scmp.eq.s32.totalorder %s15, 0
    %p126 = por %p124, %p125
    %p127 = scmp.le.s32.totalorder 1, %s9
    %p128 = scmp.lt.s32.totalorder %s9, 3
    %p129 = pnand %p127, %p128
    %p130 = pneg %p129
    // Predicated region
    $region9: #{_lambda_.1} parent=5 // pred_check
      _
    $region10: #{_lambda_.1} parent=5 // pred_check_branch
      %132 = sbr.rel (%p129) target = $region12
    $region11: #{_lambda_.1} parent=5 // pred_region
      %s133 = ssub.s32 %s9, 1
      // Predicated region
      $region13: #{_lambda_.1} parent=11 // pred_check
        %p134 = pneg %p42
      $region14: #{_lambda_.1} parent=11 // pred_check_branch
        %136 = sbr.rel (%p134) target = $region16
      $region15: #{_lambda_.1} parent=11 // pred_region
        _
      $region16: #{_lambda_.1} parent=11 // pred_fallthru
        _
      // Predicated region
      $region17: #{_lambda_.1} parent=11 // pred_check
        %p137 = pneg %p63
      $region18: #{_lambda_.1} parent=11 // pred_check_branch
        %139 = sbr.rel (%p137) target = $region20
      $region19: #{_lambda_.1} parent=11 // pred_region
        _
      $region20: #{_lambda_.1} parent=11 // pred_fallthru
        _
    $region12: #{_lambda_.1} parent=5 // pred_fallthru
      _
    %p140 = scmp.lt.s32.totalorder %s9, 2
    // Predicated region
    $region21: #{_lambda_.1} parent=5 // pred_check
      %p141 = pneg %p140
    $region22: #{_lambda_.1} parent=5 // pred_check_branch
      %143 = sbr.rel (%p141) target = $region24
    $region23: #{_lambda_.1} parent=5 // pred_region
      // Predicated region
      $region25: #{_lambda_.1} parent=23 // pred_check
        %p144 = pneg %p85
      $region26: #{_lambda_.1} parent=23 // pred_check_branch
        %146 = sbr.rel (%p144) target = $region28
      $region27: #{_lambda_.1} parent=23 // pred_region
        %s147 = smul.u32 4, %s17
        %p148 = scmp.lt.s32.totalorder %s16, 1
        %s149 = scalar_select %p148, %s16, 1
        %p150 = scmp.lt.s32.totalorder %s147, 3
        %s151 = scalar_select %p150, %s147, 3
        %s152 = smul.addr %s149, 4
        %s153 = sadd.s32 %s151, %s152
        %s154 = smul.addr %s153, 4
        %s155 = scalar_lea.vmem %s2, %s154
        %s156 = smul.u32 4, %s17
      $region28: #{_lambda_.1} parent=23 // pred_fallthru
        _
    $region24: #{_lambda_.1} parent=5 // pred_fallthru
      _
    %p157 = scmp.le.s32.totalorder 1, %s9
    %p158 = scmp.lt.s32.totalorder %s9, 3
    %p159 = pnand %p157, %p158
    %p160 = pneg %p159
    // Predicated region
    $region29: #{_lambda_.1} parent=5 // pred_check
      _
    $region30: #{_lambda_.1} parent=5 // pred_check_branch
      %162 = sbr.rel (%p159) target = $region32
    $region31: #{_lambda_.1} parent=5 // pred_region
      %s163 = ssub.s32 %s9, 1
      %p164 = pneg %p42
      %p165 = pneg %p39
      %p166 = pneg %p63
      %p167 = pneg %p60
      %s168 = smul.u32 4, %s19
      %p169 = scmp.lt.s32.totalorder %s18, 1
      %s170 = scalar_select %p169, %s18, 1
      %p171 = scmp.lt.s32.totalorder %s168, 3
      %s172 = scalar_select %p171, %s168, 3
      %s173 = smul.addr %s170, 4
      %s174 = sadd.s32 %s172, %s173
      %s175 = smul.addr %s174, 4
      %s176 = scalar_lea.vmem %s2, %s175
      %p177 = pneg %p91
      %p178 = pneg %p88
      %p179 = pneg %p119
      %p180 = pneg %p116
      %s181 = smul.u32 4, %s19
      %p182 = scmp.lt.s32.totalorder %s18, 1
      %s183 = scalar_select %p182, %s18, 1
      %p184 = scmp.lt.s32.totalorder %s181, 3
      %s185 = scalar_select %p184, %s181, 3
      %s186 = smul.addr %s183, 4
      %s187 = sadd.s32 %s185, %s186
      %s188 = smul.addr %s187, 8
      %s189 = scalar_lea.vmem %s3, %s188
      %s190 = smul.u32 4, %s19
      %p191 = scmp.lt.s32.totalorder %s18, 1
      %s192 = scalar_select %p191, %s18, 1
      %p193 = scmp.lt.s32.totalorder %s190, 3
      %s194 = scalar_select %p193, %s190, 3
      %s195 = smul.addr %s192, 4
      %s196 = sadd.s32 %s194, %s195
      %s197 = smul.addr %s196, 4
      %s198 = scalar_lea.vmem %s2, %s197
      %s199 = smul.u32 4, %s19
      %s200 = smul.u32 4, %s19
      %p201 = scmp.lt.s32.totalorder %s18, 1
      %s202 = scalar_select %p201, %s18, 1
      %p203 = scmp.lt.s32.totalorder %s200, 3
      %s204 = scalar_select %p203, %s200, 3
      %s205 = smul.addr %s202, 4
      %s206 = sadd.s32 %s204, %s205
      %s207 = smul.addr %s206, 8
      %s208 = scalar_lea.vmem %s3, %s207
      %s209 = smul.u32 4, %s19
      %v210 = vld [vmem:[%s198] sm:$0xff]
      %v211 = vld [vmem:[%s198 + $0x8] sm:$0xff]
      %v212 = vld [vmem:[%s0] sm:$0xff]
      %v213 = vld [vmem:[%s1] sm:$0xff]
      %215 = vset.pattern.permute.xlu0 0
      %216 = vperm.xlu0 %215, %v213
      %v217 = vpop.permute.xlu0 %216
      %221 = vst [vmem:[#allocation1] ss:$2 sm:$0xff] %v210
      %s222 = scalar_lea.vmem [#allocation1], 16
      %223 = vst [vmem:[%s222] ss:$2 sm:$0xff] %v211
      %v224 = vld.sshfl [vmem:[#allocation1] sm:$0xff pattern:$0x75316420]
      %v225 = vld.sshfl [vmem:[#allocation1 + $0x8] sm:$0xff pattern:$0x75316420]
      %v226 = vld.sshfl [vmem:[#allocation1 + $0x10] sm:$0xff pattern:$0x75316420]
      %v227 = vld.sshfl [vmem:[#allocation1 + $0x18] sm:$0xff pattern:$0x75316420]
      %vm228 = vcmask 31744
      %v230 = vsel %vm228, %v212, 0
      %vm232 = vcmask 1043456
      %v233 = vsel %vm232, %v224, 0
      %v235 = vsel %vm232, %v225, 0
      %v237 = vsel %vm232, %v226, 0
      %v239 = vsel %vm232, %v227, 0
      %241 = vmatpush.msra.mxu0 0.0
      %242 = vmatpush.msra.mxu0 0.0
      %243 = vmatpush.msra.mxu0 0.0
      %244 = vmatpush.msra.mxu0 0.0
      %245 = vmatpush.msra.mxu0 0.0
      %246 = vmatpush.msra.mxu0 0.0
      %247 = vmatpush.msra.mxu0 0.0
      %248 = vmatpush.msra.mxu0 0.0
      %249 = vmatpush.msra.mxu0 0.0
      %250 = vmatpush.msra.mxu0 0.0
      %251 = vmatpush.msra.mxu0 0.0
      %252 = vmatpush.msra.mxu0 0.0
      %253 = vmatpush.msra.mxu0 0.0
      %254 = vmatpush.msra.mxu0 0.0
      %255 = vmatpush.msra.mxu0 0.0
      %256 = vmatpush.msra.mxu0 %v233
      %257 = vmatmul.f32.gmra.mxu0 %v230
      %v258 = vpop.f32.mrf.mxu0
      %v259 = vadd.f32 %v217, %v258
      %260 = vdwg.mxu0
      %261 = vmatpush.msra.mxu0 0.0
      %262 = vmatpush.msra.mxu0 0.0
      %263 = vmatpush.msra.mxu0 0.0
      %264 = vmatpush.msra.mxu0 0.0
      %265 = vmatpush.msra.mxu0 0.0
      %266 = vmatpush.msra.mxu0 0.0
      %267 = vmatpush.msra.mxu0 0.0
      %268 = vmatpush.msra.mxu0 0.0
      %269 = vmatpush.msra.mxu0 0.0
      %270 = vmatpush.msra.mxu0 0.0
      %271 = vmatpush.msra.mxu0 0.0
      %272 = vmatpush.msra.mxu0 0.0
      %273 = vmatpush.msra.mxu0 0.0
      %274 = vmatpush.msra.mxu0 0.0
      %275 = vmatpush.msra.mxu0 0.0
      %276 = vmatpush.msra.mxu0 %v235
      %277 = vmatmul.f32.gmra.mxu0 %v230
      %v278 = vpop.f32.mrf.mxu0
      %v279 = vadd.f32 %v217, %v278
      %280 = vdwg.mxu0
      %281 = vmatpush.msra.mxu0 0.0
      %282 = vmatpush.msra.mxu0 0.0
      %283 = vmatpush.msra.mxu0 0.0
      %284 = vmatpush.msra.mxu0 0.0
      %285 = vmatpush.msra.mxu0 0.0
      %286 = vmatpush.msra.mxu0 0.0
      %287 = vmatpush.msra.mxu0 0.0
      %288 = vmatpush.msra.mxu0 0.0
      %289 = vmatpush.msra.mxu0 0.0
      %290 = vmatpush.msra.mxu0 0.0
      %291 = vmatpush.msra.mxu0 0.0
      %292 = vmatpush.msra.mxu0 0.0
      %293 = vmatpush.msra.mxu0 0.0
      %294 = vmatpush.msra.mxu0 0.0
      %295 = vmatpush.msra.mxu0 0.0
      %296 = vmatpush.msra.mxu0 %v237
      %297 = vmatmul.f32.gmra.mxu0 %v230
      %v298 = vpop.f32.mrf.mxu0
      %v299 = vadd.f32 %v217, %v298
      %300 = vdwg.mxu0
      %301 = vmatpush.msra.mxu0 0.0
      %302 = vmatpush.msra.mxu0 0.0
      %303 = vmatpush.msra.mxu0 0.0
      %304 = vmatpush.msra.mxu0 0.0
      %305 = vmatpush.msra.mxu0 0.0
      %306 = vmatpush.msra.mxu0 0.0
      %307 = vmatpush.msra.mxu0 0.0
      %308 = vmatpush.msra.mxu0 0.0
      %309 = vmatpush.msra.mxu0 0.0
      %310 = vmatpush.msra.mxu0 0.0
      %311 = vmatpush.msra.mxu0 0.0
      %312 = vmatpush.msra.mxu0 0.0
      %313 = vmatpush.msra.mxu0 0.0
      %314 = vmatpush.msra.mxu0 0.0
      %315 = vmatpush.msra.mxu0 0.0
      %316 = vmatpush.msra.mxu0 %v239
      %317 = vmatmul.f32.gmra.mxu0 %v230
      %v318 = vpop.f32.mrf.mxu0
      %v319 = vadd.f32 %v217, %v318
      %320 = vdwg.mxu0
      %321 = vst [vmem:[%s208] sm:$0xff] %v259
      %322 = vst [vmem:[%s208 + $0x8] sm:$0xff] %v279
      %323 = vst [vmem:[%s208 + $0x10] sm:$0xff] %v299
      %324 = vst [vmem:[%s208 + $0x18] sm:$0xff] %v319
      %s325 = smul.u32 4, %s19
      %p326 = scmp.lt.s32.totalorder %s18, 1
      %s327 = scalar_select %p326, %s18, 1
      %p328 = scmp.lt.s32.totalorder %s325, 3
      %s329 = scalar_select %p328, %s325, 3
      %s330 = smul.addr %s327, 4
      %s331 = sadd.s32 %s329, %s330
      %s332 = smul.addr %s331, 8
      %s333 = scalar_lea.vmem %s3, %s332
      // Predicated region
      $region33: #{_lambda_.1} parent=31 // pred_check
        %p334 = pneg %p116
      $region34: #{_lambda_.1} parent=31 // pred_check_branch
        %336 = sbr.rel (%p334) target = $region36
      $region35: #{_lambda_.1} parent=31 // pred_region
        %s337 = smul.u32 4, %s19
      $region36: #{_lambda_.1} parent=31 // pred_fallthru
        _
    $region32: #{_lambda_.1} parent=5 // pred_fallthru
      _
    %p338 = scmp.le.s32.totalorder 2, %s9
    // Predicated region
    $region37: #{_lambda_.1} parent=5 // pred_check
      %p339 = pneg %p338
    $region38: #{_lambda_.1} parent=5 // pred_check_branch
      %341 = sbr.rel (%p339) target = $region40
    $region39: #{_lambda_.1} parent=5 // pred_region
      %s342 = ssub.s32 %s9, 2
      // Predicated region
      $region41: #{_lambda_.1} parent=39 // pred_check
        %p343 = pneg %p122
      $region42: #{_lambda_.1} parent=39 // pred_check_branch
        %345 = sbr.rel (%p343) target = $region44
      $region43: #{_lambda_.1} parent=39 // pred_region
        %s346 = smul.u32 4, %s21
        %p347 = scmp.lt.s32.totalorder %s20, 1
        %s348 = scalar_select %p347, %s20, 1
        %p349 = scmp.lt.s32.totalorder %s346, 3
        %s350 = scalar_select %p349, %s346, 3
        %s351 = smul.addr %s348, 4
        %s352 = sadd.s32 %s350, %s351
        %s353 = smul.addr %s352, 8
        %s354 = scalar_lea.vmem %s3, %s353
      $region44: #{_lambda_.1} parent=39 // pred_fallthru
        _
    $region40: #{_lambda_.1} parent=5 // pred_fallthru
      _
  $region6: #{_lambda_.1} parent=0 // loop_footer
    %s13 = sadd.s32 1, %s9
  $region7: #{_lambda_.1} parent=0 // loop_footer_branch
    %8 = sbr.rel target = $region3
  $region8: #{_lambda_.1} parent=0 // loop_exit
    _

</llo_original>
